<compile_context>
chip_gen: v7x
topology: tpu7x:2x2x1
jax: 0.10.0
libtpu: 0.0.40
codegen_flags: <defaults>
</compile_context>

<pallas_src>
import functools

import jax
import jax.numpy as jnp
from jax.experimental import pallas as pl
from jax.experimental.pallas import tpu as pltpu

LANE = 128
SUBLANE = 8
_CHUNK = SUBLANE * LANE      # 1024: alignment granule for the kernel prefix
_FOLD = 32                   # preferred accumulator rows (4 x (8,128) chains)


def _device_defaults():
    """(tile_rows, num_shards) per TPU generation (perf-review table)."""
    kind = ""
    try:
        kind = jax.devices()[0].device_kind.lower()
    except Exception:
        pass
    if "v7" in kind or "7x" in kind:
        # 2 TensorCores/chip; 32 MiB scoped-VMEM default, 64 MiB physical/TC.
        return 8192, 2
    if "v6" in kind:
        return 8192, 1
    # v5e (16 MiB default scoped VMEM), v4 and unknown devices: conservative.
    return 4096, 1


def _nrmse_kernel(*refs, total_rows, tile_rows, fold_rows, steps_per_shard,
                  with_mask):
    if with_mask:
        y_ref, yhat_ref, mask_ref, sum_ref, max_ref, min_ref = refs
    else:
        y_ref, yhat_ref, sum_ref, max_ref, min_ref = refs
        mask_ref = None

    s = pl.program_id(0)   # shard axis ("parallel": 2 TCs on v7x, else size 1)
    i = pl.program_id(1)   # row-block step within the shard ("arbitrary")

    @pl.when(i == 0)
    def _():
        sum_ref[...] = jnp.zeros_like(sum_ref)
        max_ref[...] = jnp.full_like(max_ref, -jnp.inf)
        min_ref[...] = jnp.full_like(min_ref, jnp.inf)

    # TODO(synk): int32 row math limits the kernel to < 2**31 elements
    # (asserted in the wrapper).
    row_start = (s * steps_per_shard + i) * tile_rows

    def fold(x, reduce_fn):
        # (tile_rows,128) -> (fold_rows,128): pure elementwise (VPU) reduction
        # over whole vreg tiles; fold_rows=32 gives 4 independent (8,128) add
        # chains so the dependent-op chain stays far below per-step HBM time.
        return reduce_fn(x.reshape(-1, fold_rows, LANE), axis=0)

    def accumulate(partial_rows):
        y = y_ref[...].astype(jnp.float32)
        yhat = yhat_ref[...].astype(jnp.float32)
        diff = y - yhat
        sq = diff * diff
        if with_mask:
            m = mask_ref[...]
            if m.dtype == jnp.bool_:
                sq = jnp.where(m, sq, 0.0)
            else:
                sq = m.astype(jnp.float32) * sq
        if partial_rows:
            row_ids = jax.lax.broadcasted_iota(jnp.int32, (tile_rows, LANE), 0)
            valid = (row_start + row_ids) < total_rows
            sq = jnp.where(valid, sq, 0.0)
            y_mx = jnp.where(valid, y, -jnp.inf)
            y_mn = jnp.where(valid, y, jnp.inf)
        else:
            y_mx = y
            y_mn = y
        sum_ref[...] = sum_ref[...] + fold(sq, jnp.sum)
        max_ref[...] = jnp.maximum(max_ref[...], fold(y_mx, jnp.max))
        min_ref[...] = jnp.minimum(min_ref[...], fold(y_mn, jnp.min))

    # Fully in-range blocks take the cheap unmasked path.
    @pl.when(row_start + tile_rows <= total_rows)
    def _():
        accumulate(False)

    # The (at most one per shard) partial last row-block pays for the iota.
    @pl.when(jnp.logical_and(row_start < total_rows,
                             row_start + tile_rows > total_rows))
    def _():
        accumulate(True)
    # Clamped duplicate blocks (row_start >= total_rows) are skipped entirely.


def nrmse(y, y_hat, mask=None, *, tile_rows=None, num_shards=None):
    """Pallas-backed NRMSE.  y / y_hat / mask share a shape (mask optional).

    Native dtypes are streamed as-is and cast to f32 inside the kernel; in
    particular, pass the mask as bool/int8 (not float32) to cut its HBM
    traffic 4x on this HBM-bound kernel.
    """
    n = int(y.size)
    assert int(y_hat.size) == n
    if mask is not None:
        assert int(mask.size) == n
    assert n > 0
    assert n < 2 ** 31, "nrmse kernel limited to < 2**31 elements (int32 math)"

    d_tile_rows, d_shards = _device_defaults()
    tile_rows = d_tile_rows if tile_rows is None else int(tile_rows)
    num_shards = d_shards if num_shards is None else int(num_shards)

    flats = [jnp.ravel(y), jnp.ravel(y_hat)]
    if mask is not None:
        flats.append(jnp.ravel(mask))

    # ---- ragged tail (<= 1023 elements): tiny pure-JAX epilogue ----------
    n_main = (n // _CHUNK) * _CHUNK
    if n_main < n:
        ty = flats[0][n_main:].astype(jnp.float32)
        tyh = flats[1][n_main:].astype(jnp.float32)
        tsq = (ty - tyh) ** 2
        if mask is not None:
            tsq = flats[2][n_main:].astype(jnp.float32) * tsq
        tail_sum = jnp.sum(tsq)
        tail_max = jnp.max(ty)
        tail_min = jnp.min(ty)
    else:
        tail_sum = jnp.float32(0.0)
        tail_max = jnp.float32(-jnp.inf)
        tail_min = jnp.float32(jnp.inf)

    total_sum, y_max, y_min = tail_sum, tail_max, tail_min

    if n_main > 0:
        rows = n_main // LANE            # multiple of 8
        # Common case n % 1024 == 0: no slice at all, the reshape is free.
        slabs = [(f if n_main == n else f[:n_main]).reshape(rows, LANE)
                 for f in flats]

        # Minimum sublane tile of the narrowest streamed dtype (f32: 8,
        # bf16: 16, int8/bool: 32); only constrains blocks smaller than rows.
        min_sub = SUBLANE
        for slab in slabs:
            min_sub = max(min_sub, SUBLANE * max(1, 4 // slab.dtype.itemsize))

        tile_rows = max(SUBLANE, (tile_rows // SUBLANE) * SUBLANE)
        tr = min(tile_rows, rows)
        if tr < rows:
            tr = max(min_sub, (tr // min_sub) * min_sub)
        fold_rows = _FOLD if tr % _FOLD == 0 else SUBLANE

        nblocks = pl.cdiv(rows, tr)
        num_shards = max(1, min(num_shards, nblocks))
        spb = pl.cdiv(nblocks, num_shards)      # steps per shard
        block_per_input = tr * LANE

        # Clamp so the index_map never points past the last real block; the
        # clamped duplicate blocks are skipped inside the kernel.
        def in_map(si, ii):
            return (jnp.minimum(si * spb + ii, nblocks - 1), 0)

        in_spec = pl.BlockSpec((tr, LANE), in_map)
        out_spec = pl.BlockSpec((None, fold_rows, LANE),
                                lambda si, ii: (si, 0, 0))
        part_shape = jax.ShapeDtypeStruct((num_shards, fold_rows, LANE),
                                          jnp.float32)

        kernel = functools.partial(
            _nrmse_kernel,
            total_rows=rows,
            tile_rows=tr,
            fold_rows=fold_rows,
            steps_per_shard=spb,
            with_mask=mask is not None,
        )

        bytes_in = sum(int(a.size) * a.dtype.itemsize for a in slabs)
        cost = pl.CostEstimate(
            flops=6 * n_main,
            transcendentals=0,
            bytes_accessed=bytes_in + 3 * num_shards * fold_rows * LANE * 4,
        )

        # Deliberate scoped-VMEM budget: double-buffered input blocks plus
        # headroom; worst masked-f32 case is ~28 MiB, under every chip's
        # physical VMEM (v7x: 64 MiB/TC) and under v6e/v7x 32 MiB defaults.
        blk_bytes = sum(block_per_input * a.dtype.itemsize for a in slabs)
        vmem_limit = int(max(2 * blk_bytes + (4 << 20), 16 << 20))

        sum_p, max_p, min_p = pl.pallas_call(
            kernel,
            out_shape=(part_shape, part_shape, part_shape),
            grid_spec=pltpu.PrefetchScalarGridSpec(
                num_scalar_prefetch=0,
                grid=(num_shards, spb),
                in_specs=[in_spec] * len(slabs),
                out_specs=[out_spec] * 3,
            ),
            # TODO(synk): verify on v7x (xprof) that "parallel" actually
            # splits the shard axis across the two TensorCores; if not,
            # switch the leading axis to pltpu.CORE_PARALLEL.
            compiler_params=pltpu.CompilerParams(
                dimension_semantics=("parallel", "arbitrary"),
                vmem_limit_bytes=vmem_limit),
            cost_estimate=cost,
        )(*slabs)

        # Tiny scalar epilogue: the only cross-lane reductions in the op.
        total_sum = jnp.sum(sum_p) + tail_sum
        y_max = jnp.maximum(jnp.max(max_p), tail_max)
        y_min = jnp.minimum(jnp.min(min_p), tail_min)

    mse = total_sum / jnp.float32(n)
    return jnp.sqrt(mse) / (y_max - y_min)


def nrmse_ref(y, y_hat, mask=None):
    if mask is None:
        mask = jnp.ones_like(y_hat)
    mse = jnp.mean(mask * (y - y_hat) ** 2)
    return jnp.sqrt(mse) / (jnp.max(y) - jnp.min(y))


if __name__ == "__main__":
    key = jax.random.PRNGKey(0)
    k1, k2, k3 = jax.random.split(key, 3)

    def check(out, ref):
        assert jnp.allclose(out, ref, rtol=1e-5, atol=1e-6), (out, ref)

    # small NCHW-like shape (n = 2048, 1024-aligned -> pure kernel path,
    # no wrapper-side copy at all)
    shape = (2, 4, 16, 16)
    y = jax.random.normal(k1, shape, dtype=jnp.float32)
    y_hat = jax.random.normal(k2, shape, dtype=jnp.float32)
    mask = (jax.random.uniform(k3, shape) > 0.3).astype(jnp.float32)
    out = jax.block_until_ready(nrmse(y, y_hat, mask))
    check(out, nrmse_ref(y, y_hat, mask))
    out = jax.block_until_ready(nrmse(y, y_hat, None))
    check(out, nrmse_ref(y, y_hat, None))

    # ragged n > 1024 (n = 1344): kernel prefix + <=1023-element tail epilogue
    shape2 = (3, 7, 64)
    y2 = jax.random.normal(k1, shape2, dtype=jnp.float32)
    y2_hat = jax.random.normal(k2, shape2, dtype=jnp.float32)
    out2 = jax.block_until_ready(nrmse(y2, y2_hat))
    check(out2, nrmse_ref(y2, y2_hat))

    # tiny n < 1024 (n = 105): pure-JAX fallback path
    shape3 = (3, 5, 7)
    y3 = jax.random.normal(k1, shape3, dtype=jnp.float32)
    y3_hat = jax.random.normal(k2, shape3, dtype=jnp.float32)
    out3 = jax.block_until_ready(nrmse(y3, y3_hat))
    check(out3, nrmse_ref(y3, y3_hat))

    # multi-block + 2 shards with a clamped duplicate block and a partial
    # last row-block (rows=40, tr=16 -> blocks of 16/16/8 rows, 2x2 grid).
    shape4 = (5, 8, 128)
    y4 = jax.random.normal(k1, shape4, dtype=jnp.float32)
    y4_hat = jax.random.normal(k2, shape4, dtype=jnp.float32)
    m4 = (jax.random.uniform(k3, shape4) > 0.5).astype(jnp.float32)
    out4 = jax.block_until_ready(
        nrmse(y4, y4_hat, m4, tile_rows=16, num_shards=2))
    check(out4, nrmse_ref(y4, y4_hat, m4))

    print("KERNEL_OK")
</pallas_src>

<mosaic_0001>
module attributes {stable_mosaic.version = 11 : i64} {
  func.func @_nrmse_kernel(%arg0: i32, %arg1: i32, %arg2: memref<16x128xf32, #tpu.memory_space<vmem>>, %arg3: memref<16x128xf32, #tpu.memory_space<vmem>>, %arg4: memref<16x128xf32, #tpu.memory_space<vmem>>, %arg5: memref<1x8x128xf32, #tpu.memory_space<vmem>>, %arg6: memref<1x8x128xf32, #tpu.memory_space<vmem>>, %arg7: memref<1x8x128xf32, #tpu.memory_space<vmem>>) attributes {dimension_semantics = [#tpu.dimension_semantics<parallel>, #tpu.dimension_semantics<arbitrary>], iteration_bounds = array<i64: 1, 1>, scalar_prefetch = 0 : i64, scratch_operands = 0 : i64, tpu.core_type = #tpu.core_type<tc>, window_params = [{transform_indices = @transform_0, window_bounds = array<i64: 16, 128>}, {transform_indices = @transform_1, window_bounds = array<i64: 16, 128>}, {transform_indices = @transform_2, window_bounds = array<i64: 16, 128>}, {transform_indices = @transform_3, window_bounds = array<i64: 1, 8, 128>}, {transform_indices = @transform_4, window_bounds = array<i64: 1, 8, 128>}, {transform_indices = @transform_5, window_bounds = array<i64: 1, 8, 128>}]} {
    %c0_i32 = arith.constant 0 : i32
    %0 = arith.cmpi eq, %arg1, %c0_i32 : i32
    %1 = arith.extui %0 : i1 to i32
    %c0_i32_0 = arith.constant 0 : i32
    %2 = arith.cmpi ne, %1, %c0_i32_0 : i32
    scf.if %2 {
      %cst = arith.constant 0.000000e+00 : f32
      %16 = vector.broadcast %cst : f32 to vector<8x128xf32>
      %c0 = arith.constant 0 : index
      %c0_8 = arith.constant 0 : index
      %c0_9 = arith.constant 0 : index
      %17 = vector.load %arg5[%c0, %c0_8, %c0_9] : memref<1x8x128xf32, #tpu.memory_space<vmem>>, vector<1x8x128xf32>
      %18 = vector.shape_cast %17 : vector<1x8x128xf32> to vector<8x128xf32>
      %19 = vector.shape_cast %16 : vector<8x128xf32> to vector<1x8x128xf32>
      tpu.vector_store %arg5[%c0, %c0_8, %c0_9], %19 {strides = array<i32>} : memref<1x8x128xf32, #tpu.memory_space<vmem>>, vector<1x8x128xf32>,
      %cst_10 = arith.constant 0xFF800000 : f32
      %20 = vector.broadcast %cst_10 : f32 to vector<8x128xf32>
      %c0_11 = arith.constant 0 : index
      %c0_12 = arith.constant 0 : index
      %c0_13 = arith.constant 0 : index
      %21 = vector.load %arg6[%c0_11, %c0_12, %c0_13] : memref<1x8x128xf32, #tpu.memory_space<vmem>>, vector<1x8x128xf32>
      %22 = vector.shape_cast %21 : vector<1x8x128xf32> to vector<8x128xf32>
      %23 = vector.shape_cast %20 : vector<8x128xf32> to vector<1x8x128xf32>
      tpu.vector_store %arg6[%c0_11, %c0_12, %c0_13], %23 {strides = array<i32>} : memref<1x8x128xf32, #tpu.memory_space<vmem>>, vector<1x8x128xf32>,
      %cst_14 = arith.constant 0x7F800000 : f32
      %24 = vector.broadcast %cst_14 : f32 to vector<8x128xf32>
      %c0_15 = arith.constant 0 : index
      %c0_16 = arith.constant 0 : index
      %c0_17 = arith.constant 0 : index
      %25 = vector.load %arg7[%c0_15, %c0_16, %c0_17] : memref<1x8x128xf32, #tpu.memory_space<vmem>>, vector<1x8x128xf32>
      %26 = vector.shape_cast %25 : vector<1x8x128xf32> to vector<8x128xf32>
      %27 = vector.shape_cast %24 : vector<8x128xf32> to vector<1x8x128xf32>
      tpu.vector_store %arg7[%c0_15, %c0_16, %c0_17], %27 {strides = array<i32>} : memref<1x8x128xf32, #tpu.memory_space<vmem>>, vector<1x8x128xf32>,
    } else {
    }
    %c1_i32 = arith.constant 1 : i32
    %3 = arith.muli %arg0, %c1_i32 : i32
    %4 = arith.addi %3, %arg1 : i32
    %c16_i32 = arith.constant 16 : i32
    %5 = arith.muli %4, %c16_i32 : i32
    %c16_i32_1 = arith.constant 16 : i32
    %6 = arith.addi %5, %c16_i32_1 : i32
    %c16_i32_2 = arith.constant 16 : i32
    %7 = arith.cmpi sle, %6, %c16_i32_2 : i32
    %8 = arith.extui %7 : i1 to i32
    %c0_i32_3 = arith.constant 0 : i32
    %9 = arith.cmpi ne, %8, %c0_i32_3 : i32
    scf.if %9 {
      %c0 = arith.constant 0 : index
      %c0_8 = arith.constant 0 : index
      %16 = vector.load %arg2[%c0, %c0_8] : memref<16x128xf32, #tpu.memory_space<vmem>>, vector<16x128xf32>
      %c0_9 = arith.constant 0 : index
      %c0_10 = arith.constant 0 : index
      %17 = vector.load %arg3[%c0_9, %c0_10] : memref<16x128xf32, #tpu.memory_space<vmem>>, vector<16x128xf32>
      %18 = arith.subf %16, %17 : vector<16x128xf32>
      %19 = arith.mulf %18, %18 : vector<16x128xf32>
      %c0_11 = arith.constant 0 : index
      %c0_12 = arith.constant 0 : index
      %20 = vector.load %arg4[%c0_11, %c0_12] : memref<16x128xf32, #tpu.memory_space<vmem>>, vector<16x128xf32>
      %21 = arith.mulf %20, %19 : vector<16x128xf32>
      %c0_13 = arith.constant 0 : index
      %c0_14 = arith.constant 0 : index
      %c0_15 = arith.constant 0 : index
      %22 = vector.load %arg5[%c0_13, %c0_14, %c0_15] : memref<1x8x128xf32, #tpu.memory_space<vmem>>, vector<1x8x128xf32>
      %23 = vector.shape_cast %22 : vector<1x8x128xf32> to vector<8x128xf32>
      %24 = vector.shape_cast %21 : vector<16x128xf32> to vector<2x8x128xf32>
      %cst = arith.constant dense<0.000000e+00> : vector<8x128xf32>
      %25 = vector.multi_reduction <add>, %24, %cst [0] : vector<2x8x128xf32> to vector<8x128xf32>
      %26 = arith.addf %23, %25 : vector<8x128xf32>
      %c0_16 = arith.constant 0 : index
      %c0_17 = arith.constant 0 : index
      %c0_18 = arith.constant 0 : index
      %27 = vector.load %arg5[%c0_16, %c0_17, %c0_18] : memref<1x8x128xf32, #tpu.memory_space<vmem>>, vector<1x8x128xf32>
      %28 = vector.shape_cast %27 : vector<1x8x128xf32> to vector<8x128xf32>
      %29 = vector.shape_cast %26 : vector<8x128xf32> to vector<1x8x128xf32>
      tpu.vector_store %arg5[%c0_16, %c0_17, %c0_18], %29 {strides = array<i32>} : memref<1x8x128xf32, #tpu.memory_space<vmem>>, vector<1x8x128xf32>,
      %c0_19 = arith.constant 0 : index
      %c0_20 = arith.constant 0 : index
      %c0_21 = arith.constant 0 : index
      %30 = vector.load %arg6[%c0_19, %c0_20, %c0_21] : memref<1x8x128xf32, #tpu.memory_space<vmem>>, vector<1x8x128xf32>
      %31 = vector.shape_cast %30 : vector<1x8x128xf32> to vector<8x128xf32>
      %32 = vector.shape_cast %16 : vector<16x128xf32> to vector<2x8x128xf32>
      %cst_22 = arith.constant dense<0xFF800000> : vector<8x128xf32>
      %33 = vector.multi_reduction <maximumf>, %32, %cst_22 [0] : vector<2x8x128xf32> to vector<8x128xf32>
      %34 = arith.maximumf %31, %33 : vector<8x128xf32>
      %c0_23 = arith.constant 0 : index
      %c0_24 = arith.constant 0 : index
      %c0_25 = arith.constant 0 : index
      %35 = vector.load %arg6[%c0_23, %c0_24, %c0_25] : memref<1x8x128xf32, #tpu.memory_space<vmem>>, vector<1x8x128xf32>
      %36 = vector.shape_cast %35 : vector<1x8x128xf32> to vector<8x128xf32>
      %37 = vector.shape_cast %34 : vector<8x128xf32> to vector<1x8x128xf32>
      tpu.vector_store %arg6[%c0_23, %c0_24, %c0_25], %37 {strides = array<i32>} : memref<1x8x128xf32, #tpu.memory_space<vmem>>, vector<1x8x128xf32>,
      %c0_26 = arith.constant 0 : index
      %c0_27 = arith.constant 0 : index
      %c0_28 = arith.constant 0 : index
      %38 = vector.load %arg7[%c0_26, %c0_27, %c0_28] : memref<1x8x128xf32, #tpu.memory_space<vmem>>, vector<1x8x128xf32>
      %39 = vector.shape_cast %38 : vector<1x8x128xf32> to vector<8x128xf32>
      %40 = vector.shape_cast %16 : vector<16x128xf32> to vector<2x8x128xf32>
      %cst_29 = arith.constant dense<0x7F800000> : vector<8x128xf32>
      %41 = vector.multi_reduction <minimumf>, %40, %cst_29 [0] : vector<2x8x128xf32> to vector<8x128xf32>
      %42 = arith.minimumf %39, %41 : vector<8x128xf32>
      %c0_30 = arith.constant 0 : index
      %c0_31 = arith.constant 0 : index
      %c0_32 = arith.constant 0 : index
      %43 = vector.load %arg7[%c0_30, %c0_31, %c0_32] : memref<1x8x128xf32, #tpu.memory_space<vmem>>, vector<1x8x128xf32>
      %44 = vector.shape_cast %43 : vector<1x8x128xf32> to vector<8x128xf32>
      %45 = vector.shape_cast %42 : vector<8x128xf32> to vector<1x8x128xf32>
      tpu.vector_store %arg7[%c0_30, %c0_31, %c0_32], %45 {strides = array<i32>} : memref<1x8x128xf32, #tpu.memory_space<vmem>>, vector<1x8x128xf32>,
    } else {
    }
    %c16_i32_4 = arith.constant 16 : i32
    %10 = arith.cmpi slt, %5, %c16_i32_4 : i32
    %c16_i32_5 = arith.constant 16 : i32
    %11 = arith.addi %5, %c16_i32_5 : i32
    %c16_i32_6 = arith.constant 16 : i32
    %12 = arith.cmpi sgt, %11, %c16_i32_6 : i32
    %13 = arith.andi %10, %12 : i1
    %14 = arith.extui %13 : i1 to i32
    %c0_i32_7 = arith.constant 0 : i32
    %15 = arith.cmpi ne, %14, %c0_i32_7 : i32
    scf.if %15 {
      %c0 = arith.constant 0 : index
      %c0_8 = arith.constant 0 : index
      %16 = vector.load %arg2[%c0, %c0_8] : memref<16x128xf32, #tpu.memory_space<vmem>>, vector<16x128xf32>
      %c0_9 = arith.constant 0 : index
      %c0_10 = arith.constant 0 : index
      %17 = vector.load %arg3[%c0_9, %c0_10] : memref<16x128xf32, #tpu.memory_space<vmem>>, vector<16x128xf32>
      %18 = arith.subf %16, %17 : vector<16x128xf32>
      %19 = arith.mulf %18, %18 : vector<16x128xf32>
      %c0_11 = arith.constant 0 : index
      %c0_12 = arith.constant 0 : index
      %20 = vector.load %arg4[%c0_11, %c0_12] : memref<16x128xf32, #tpu.memory_space<vmem>>, vector<16x128xf32>
      %21 = arith.mulf %20, %19 : vector<16x128xf32>
      %22 = tpu.iota {dimensions = array<i32: 0>} : vector<16x128xi32>
      %23 = vector.broadcast %5 : i32 to vector<16x128xi32>
      %24 = arith.addi %23, %22 : vector<16x128xi32>
      %c16_i32_13 = arith.constant 16 : i32
      %25 = vector.broadcast %c16_i32_13 : i32 to vector<16x128xi32>
      %26 = arith.cmpi slt, %24, %25 : vector<16x128xi32>
      %cst = arith.constant 0.000000e+00 : f32
      %27 = vector.broadcast %cst : f32 to vector<16x128xf32>
      %28 = arith.select %26, %21, %27 : vector<16x128xi1>, vector<16x128xf32>
      %cst_14 = arith.constant 0xFF800000 : f32
      %29 = vector.broadcast %cst_14 : f32 to vector<16x128xf32>
      %30 = arith.select %26, %16, %29 : vector<16x128xi1>, vector<16x128xf32>
      %cst_15 = arith.constant 0x7F800000 : f32
      %31 = vector.broadcast %cst_15 : f32 to vector<16x128xf32>
      %32 = arith.select %26, %16, %31 : vector<16x128xi1>, vector<16x128xf32>
      %c0_16 = arith.constant 0 : index
      %c0_17 = arith.constant 0 : index
      %c0_18 = arith.constant 0 : index
      %33 = vector.load %arg5[%c0_16, %c0_17, %c0_18] : memref<1x8x128xf32, #tpu.memory_space<vmem>>, vector<1x8x128xf32>
      %34 = vector.shape_cast %33 : vector<1x8x128xf32> to vector<8x128xf32>
      %35 = vector.shape_cast %28 : vector<16x128xf32> to vector<2x8x128xf32>
      %cst_19 = arith.constant dense<0.000000e+00> : vector<8x128xf32>
      %36 = vector.multi_reduction <add>, %35, %cst_19 [0] : vector<2x8x128xf32> to vector<8x128xf32>
      %37 = arith.addf %34, %36 : vector<8x128xf32>
      %c0_20 = arith.constant 0 : index
      %c0_21 = arith.constant 0 : index
      %c0_22 = arith.constant 0 : index
      %38 = vector.load %arg5[%c0_20, %c0_21, %c0_22] : memref<1x8x128xf32, #tpu.memory_space<vmem>>, vector<1x8x128xf32>
      %39 = vector.shape_cast %38 : vector<1x8x128xf32> to vector<8x128xf32>
      %40 = vector.shape_cast %37 : vector<8x128xf32> to vector<1x8x128xf32>
      tpu.vector_store %arg5[%c0_20, %c0_21, %c0_22], %40 {strides = array<i32>} : memref<1x8x128xf32, #tpu.memory_space<vmem>>, vector<1x8x128xf32>,
      %c0_23 = arith.constant 0 : index
      %c0_24 = arith.constant 0 : index
      %c0_25 = arith.constant 0 : index
      %41 = vector.load %arg6[%c0_23, %c0_24, %c0_25] : memref<1x8x128xf32, #tpu.memory_space<vmem>>, vector<1x8x128xf32>
      %42 = vector.shape_cast %41 : vector<1x8x128xf32> to vector<8x128xf32>
      %43 = vector.shape_cast %30 : vector<16x128xf32> to vector<2x8x128xf32>
      %cst_26 = arith.constant dense<0xFF800000> : vector<8x128xf32>
      %44 = vector.multi_reduction <maximumf>, %43, %cst_26 [0] : vector<2x8x128xf32> to vector<8x128xf32>
      %45 = arith.maximumf %42, %44 : vector<8x128xf32>
      %c0_27 = arith.constant 0 : index
      %c0_28 = arith.constant 0 : index
      %c0_29 = arith.constant 0 : index
      %46 = vector.load %arg6[%c0_27, %c0_28, %c0_29] : memref<1x8x128xf32, #tpu.memory_space<vmem>>, vector<1x8x128xf32>
      %47 = vector.shape_cast %46 : vector<1x8x128xf32> to vector<8x128xf32>
      %48 = vector.shape_cast %45 : vector<8x128xf32> to vector<1x8x128xf32>
      tpu.vector_store %arg6[%c0_27, %c0_28, %c0_29], %48 {strides = array<i32>} : memref<1x8x128xf32, #tpu.memory_space<vmem>>, vector<1x8x128xf32>,
      %c0_30 = arith.constant 0 : index
      %c0_31 = arith.constant 0 : index
      %c0_32 = arith.constant 0 : index
      %49 = vector.load %arg7[%c0_30, %c0_31, %c0_32] : memref<1x8x128xf32, #tpu.memory_space<vmem>>, vector<1x8x128xf32>
      %50 = vector.shape_cast %49 : vector<1x8x128xf32> to vector<8x128xf32>
      %51 = vector.shape_cast %32 : vector<16x128xf32> to vector<2x8x128xf32>
      %cst_33 = arith.constant dense<0x7F800000> : vector<8x128xf32>
      %52 = vector.multi_reduction <minimumf>, %51, %cst_33 [0] : vector<2x8x128xf32> to vector<8x128xf32>
      %53 = arith.minimumf %50, %52 : vector<8x128xf32>
      %c0_34 = arith.constant 0 : index
      %c0_35 = arith.constant 0 : index
      %c0_36 = arith.constant 0 : index
      %54 = vector.load %arg7[%c0_34, %c0_35, %c0_36] : memref<1x8x128xf32, #tpu.memory_space<vmem>>, vector<1x8x128xf32>
      %55 = vector.shape_cast %54 : vector<1x8x128xf32> to vector<8x128xf32>
      %56 = vector.shape_cast %53 : vector<8x128xf32> to vector<1x8x128xf32>
      tpu.vector_store %arg7[%c0_34, %c0_35, %c0_36], %56 {strides = array<i32>} : memref<1x8x128xf32, #tpu.memory_space<vmem>>, vector<1x8x128xf32>,
    } else {
    }
    return
  }
  func.func @transform_0(%arg0: i32, %arg1: i32) -> (i32, i32) {
    %c1_i32 = arith.constant 1 : i32
    %0 = arith.muli %arg0, %c1_i32 : i32
    %1 = arith.addi %0, %arg1 : i32
    %c0_i32 = arith.constant 0 : i32
    %2 = arith.minsi %1, %c0_i32 : i32
    %c0_i32_0 = arith.constant 0 : i32
    %c0_i32_1 = arith.constant 0 : i32
    return %2, %c0_i32_0 : i32, i32
  }
  func.func @transform_1(%arg0: i32, %arg1: i32) -> (i32, i32) {
    %c1_i32 = arith.constant 1 : i32
    %0 = arith.muli %arg0, %c1_i32 : i32
    %1 = arith.addi %0, %arg1 : i32
    %c0_i32 = arith.constant 0 : i32
    %2 = arith.minsi %1, %c0_i32 : i32
    %c0_i32_0 = arith.constant 0 : i32
    %c0_i32_1 = arith.constant 0 : i32
    return %2, %c0_i32_0 : i32, i32
  }
  func.func @transform_2(%arg0: i32, %arg1: i32) -> (i32, i32) {
    %c1_i32 = arith.constant 1 : i32
    %0 = arith.muli %arg0, %c1_i32 : i32
    %1 = arith.addi %0, %arg1 : i32
    %c0_i32 = arith.constant 0 : i32
    %2 = arith.minsi %1, %c0_i32 : i32
    %c0_i32_0 = arith.constant 0 : i32
    %c0_i32_1 = arith.constant 0 : i32
    return %2, %c0_i32_0 : i32, i32
  }
  func.func @transform_3(%arg0: i32, %arg1: i32) -> (i32, i32, i32) {
    %c0_i32 = arith.constant 0 : i32
    %c0_i32_0 = arith.constant 0 : i32
    %c0_i32_1 = arith.constant 0 : i32
    return %arg0, %c0_i32, %c0_i32_0 : i32, i32, i32
  }
  func.func @transform_4(%arg0: i32, %arg1: i32) -> (i32, i32, i32) {
    %c0_i32 = arith.constant 0 : i32
    %c0_i32_0 = arith.constant 0 : i32
    %c0_i32_1 = arith.constant 0 : i32
    return %arg0, %c0_i32, %c0_i32_0 : i32, i32, i32
  }
  func.func @transform_5(%arg0: i32, %arg1: i32) -> (i32, i32, i32) {
    %c0_i32 = arith.constant 0 : i32
    %c0_i32_0 = arith.constant 0 : i32
    %c0_i32_1 = arith.constant 0 : i32
    return %arg0, %c0_i32, %c0_i32_0 : i32, i32, i32
  }
}

</mosaic_0001>

<llo_original>
// kernel: tpu_custom_call.1
$region0: #{tpu_custom_call.1}
  #allocation0 [shape = 'u32[]', space=smem, size = 0x4, offset = 0x4, fixed_abs, tag = 'smem constant byte address 0x4 - core index']
  #allocation1 [shape = 'u32[144,128]{1,0:T(1,128)}', space=vmem, size = 0x12000, scoped, tag = 'internal scratch']
  %s0 = inlined_call_operand.hbm [shape: f32[16,128], index: 0, kind: input, shape index: {}]
  %s1 = inlined_call_operand.hbm [shape: f32[16,128], index: 1, kind: input, shape index: {}]
  %s2 = inlined_call_operand.hbm [shape: f32[16,128], index: 2, kind: input, shape index: {}]
  %s3 = inlined_call_operand.hbm [shape: f32[1,8,128], index: 3, kind: output, shape index: {0}]
  %s4 = inlined_call_operand.hbm [shape: f32[1,8,128], index: 4, kind: output, shape index: {1}]
  %s5 = inlined_call_operand.hbm [shape: f32[1,8,128], index: 5, kind: output, shape index: {2}]
  %6 = xla_tuple %s3, %s4, %s5
  %s7 = sld [smem:[#allocation0]]
  $region62: #{tpu_custom_call.1} parent=0
    _
  %s9 = ssub.s32 1, %s7
  %s10 = scalar_select 0, %s9, %s7
  $region1: #{tpu_custom_call.1} parent=0
    #allocation2 [shape = 'u8[8192]{0}', space=vmem, size = 0x2000, scoped, tag = 'input window, operand 0, single buffered']
    #allocation3 [shape = 's32[1]{0}', space=sflag, size = 0x4, scoped, tag = 'scoped memory for tpu_custom_call.1']
    #allocation4 [shape = 's32[1]{0}', space=sflag, size = 0x4, scoped, tag = 'scoped memory for tpu_custom_call.1']
    #allocation5 [shape = 'u8[8192]{0}', space=vmem, size = 0x2000, scoped, tag = 'input window, operand 1, single buffered']
    #allocation6 [shape = 's32[1]{0}', space=sflag, size = 0x4, scoped, tag = 'scoped memory for tpu_custom_call.1']
    #allocation7 [shape = 'u8[8192]{0}', space=vmem, size = 0x2000, scoped, tag = 'input window, operand 2, single buffered']
    #allocation8 [shape = 'u8[4096]{0}', space=vmem, size = 0x1000, scoped, tag = 'output window, operand 0, single buffered']
    #allocation9 [shape = 'u8[4096]{0}', space=vmem, size = 0x1000, scoped, tag = 'output window, operand 1, single buffered']
    #allocation10 [shape = 's32[1]{0}', space=sflag, size = 0x4, scoped, tag = 'scoped memory for tpu_custom_call.1']
    #allocation11 [shape = 'u8[4096]{0}', space=vmem, size = 0x1000, scoped, tag = 'output window, operand 2, single buffered']
    %11 = vsyncpa [#allocation3], 0
    %12 = vsyncpa [#allocation6], 0
    %13 = vsyncpa [#allocation4], 0
    %14 = vsyncpa [#allocation10], 0
    // Predicated region
    $region2: #{tpu_custom_call.1} parent=1 // pred_check
      _
    $region3: #{tpu_custom_call.1} parent=1 // pred_check_branch
      %16 = sbr.rel (0) target = $region5
    $region4: #{tpu_custom_call.1} parent=1 // pred_region
      %s17 = sadd.s32 0, 0
      %p18 = scmp.lt.s32.totalorder %s17, 0
      %s19 = scalar_select %p18, %s17, 0
      %s20 = smul.u32 2, %s19
      %s22 = ssub.s32 256, 256
      %23 = vsyncadd [#allocation3], %s22
      %s24 = smul.addr %s20, 128
      %s25 = scalar_lea.hbm %s0, %s24
      %s26 = sshll.u32 [#allocation2], 4
      %s27 = int_to_ptr.vmem [resolvable:$true] %s26
      %32 = dma.hbm_to_vmem [thread:$0]  %s25, 256, %s27, [#allocation3], 128, 128, 8
    $region5: #{tpu_custom_call.1} parent=1 // pred_fallthru
      _
    // Predicated region
    $region6: #{tpu_custom_call.1} parent=1 // pred_check
      _
    $region7: #{tpu_custom_call.1} parent=1 // pred_check_branch
      %34 = sbr.rel (0) target = $region9
    $region8: #{tpu_custom_call.1} parent=1 // pred_region
      %s35 = sadd.s32 0, 0
      %p36 = scmp.lt.s32.totalorder %s35, 0
      %s37 = scalar_select %p36, %s35, 0
      %s38 = smul.u32 2, %s37
      %s40 = ssub.s32 256, 256
      %41 = vsyncadd [#allocation6], %s40
      %s42 = smul.addr %s38, 128
      %s43 = scalar_lea.hbm %s1, %s42
      %s44 = sshll.u32 [#allocation5], 4
      %s45 = int_to_ptr.vmem [resolvable:$true] %s44
      %50 = dma.hbm_to_vmem [thread:$0]  %s43, 256, %s45, [#allocation6], 128, 128, 8
    $region9: #{tpu_custom_call.1} parent=1 // pred_fallthru
      _
    // Predicated region
    $region10: #{tpu_custom_call.1} parent=1 // pred_check
      _
    $region11: #{tpu_custom_call.1} parent=1 // pred_check_branch
      %52 = sbr.rel (0) target = $region13
    $region12: #{tpu_custom_call.1} parent=1 // pred_region
      %s53 = sadd.s32 0, 0
      %p54 = scmp.lt.s32.totalorder %s53, 0
      %s55 = scalar_select %p54, %s53, 0
      %s56 = smul.u32 2, %s55
      %s58 = ssub.s32 256, 256
      %59 = vsyncadd [#allocation6], %s58
      %s60 = smul.addr %s56, 128
      %s61 = scalar_lea.hbm %s2, %s60
      %s62 = sshll.u32 [#allocation7], 4
      %s63 = int_to_ptr.vmem [resolvable:$true] %s62
      %68 = dma.hbm_to_vmem [thread:$0]  %s61, 256, %s63, [#allocation6], 128, 128, 8
    $region13: #{tpu_custom_call.1} parent=1 // pred_fallthru
      _
    // Predicated region
    $region14: #{tpu_custom_call.1} parent=1 // pred_check
      _
    $region15: #{tpu_custom_call.1} parent=1 // pred_check_branch
      %70 = sbr.rel (0) target = $region17
    $region16: #{tpu_custom_call.1} parent=1 // pred_region
      %71 = dma.done [#allocation3], 256
    $region17: #{tpu_custom_call.1} parent=1 // pred_fallthru
      _
    // Predicated region
    $region18: #{tpu_custom_call.1} parent=1 // pred_check
      _
    $region19: #{tpu_custom_call.1} parent=1 // pred_check_branch
      %73 = sbr.rel (0) target = $region21
    $region20: #{tpu_custom_call.1} parent=1 // pred_region
      %74 = dma.done [#allocation6], 256
    $region21: #{tpu_custom_call.1} parent=1 // pred_fallthru
      _
    // Predicated region
    $region22: #{tpu_custom_call.1} parent=1 // pred_check
      _
    $region23: #{tpu_custom_call.1} parent=1 // pred_check_branch
      %76 = sbr.rel (0) target = $region25
    $region24: #{tpu_custom_call.1} parent=1 // pred_region
      %77 = dma.done [#allocation6], 256
    $region25: #{tpu_custom_call.1} parent=1 // pred_fallthru
      _
    %s78 = sadd.s32 0, 0
    %p79 = scmp.lt.s32.totalorder %s78, 0
    %s80 = scalar_select %p79, %s78, 0
    %s81 = smul.u32 2, %s80
    %s82 = sadd.s32 0, 0
    %p83 = scmp.lt.s32.totalorder %s82, 0
    %s84 = scalar_select %p83, %s82, 0
    %s85 = smul.u32 2, %s84
    %s86 = sadd.s32 0, 0
    %p87 = scmp.lt.s32.totalorder %s86, 0
    %s88 = scalar_select %p87, %s86, 0
    %s89 = smul.u32 2, %s88
    %p90 = scmp.eq.s32.totalorder 0, 0
    // Predicated region
    $region26: #{tpu_custom_call.1} parent=1 // pred_check
      %p91 = pneg %p90
    $region27: #{tpu_custom_call.1} parent=1 // pred_check_branch
      %93 = sbr.rel (%p91) target = $region29
    $region28: #{tpu_custom_call.1} parent=1 // pred_region
      %94 = vst [vmem:[#allocation8] sm:$0xff] 0.0
      %95 = vst [vmem:[#allocation9] sm:$0xff] -inf
      %96 = vst [vmem:[#allocation11] sm:$0xff] inf
    $region29: #{tpu_custom_call.1} parent=1 // pred_fallthru
      _
    %s97 = sadd.s32 0, 0
    %s98 = smul.u32 %s97, 16
    %s99 = sadd.s32 %s98, 16
    %p100 = scmp.le.s32.totalorder %s99, 16
    // Predicated region
    $region30: #{tpu_custom_call.1} parent=1 // pred_check
      %p101 = pneg %p100
    $region31: #{tpu_custom_call.1} parent=1 // pred_check_branch
      %103 = sbr.rel (%p101) target = $region33
    $region32: #{tpu_custom_call.1} parent=1 // pred_region
      %v104 = vld [vmem:[#allocation2] sm:$0xff]
      %v105 = vld [vmem:[#allocation2 + $0x8] sm:$0xff]
      %v106 = vld [vmem:[#allocation5] sm:$0xff]
      %v107 = vld [vmem:[#allocation5 + $0x8] sm:$0xff]
      %v108 = vsub.f32 %v104, %v106
      %v109 = vsub.f32 %v105, %v107
      %v110 = vmul.f32 %v108, %v108
      %v111 = vmul.f32 %v109, %v109
      %v112 = vld [vmem:[#allocation7] sm:$0xff]
      %v113 = vld [vmem:[#allocation7 + $0x8] sm:$0xff]
      %v114 = vmul.f32 %v112, %v110
      %v115 = vmul.f32 %v113, %v111
      %v116 = vld [vmem:[#allocation8] sm:$0xff]
      %v117 = vadd.f32 %v114, %v115
      %v118 = vadd.f32 %v116, %v117
      %119 = vst [vmem:[#allocation8] sm:$0xff] %v118
      %v120 = vld [vmem:[#allocation9] sm:$0xff]
      %v121 = vmax.f32 %v104, %v105
      %v122 = vmax.f32 %v120, %v121
      %123 = vst [vmem:[#allocation9] sm:$0xff] %v122
      %v124 = vld [vmem:[#allocation11] sm:$0xff]
      %v125 = vmin.f32 %v104, %v105
      %v126 = vmin.f32 %v124, %v125
      %127 = vst [vmem:[#allocation11] sm:$0xff] %v126
    $region33: #{tpu_custom_call.1} parent=1 // pred_fallthru
      _
    %p128 = scmp.lt.s32.totalorder %s98, 16
    %p129 = scmp.gt.s32.totalorder %s99, 16
    %p130 = pnand %p128, %p129
    %p131 = pneg %p130
    // Predicated region
    $region34: #{tpu_custom_call.1} parent=1 // pred_check
      _
    $region35: #{tpu_custom_call.1} parent=1 // pred_check_branch
      %133 = sbr.rel (%p130) target = $region37
    $region36: #{tpu_custom_call.1} parent=1 // pred_region
      %v134 = vld [vmem:[#allocation2] sm:$0xff]
      %v135 = vld [vmem:[#allocation2 + $0x8] sm:$0xff]
      %v136 = vld [vmem:[#allocation5] sm:$0xff]
      %v137 = vld [vmem:[#allocation5 + $0x8] sm:$0xff]
      %v138 = vsub.f32 %v134, %v136
      %v139 = vsub.f32 %v135, %v137
      %v140 = vmul.f32 %v138, %v138
      %v141 = vmul.f32 %v139, %v139
      %v142 = vld [vmem:[#allocation7] sm:$0xff]
      %v143 = vld [vmem:[#allocation7 + $0x8] sm:$0xff]
      %v144 = vmul.f32 %v142, %v140
      %v145 = vmul.f32 %v143, %v141
      %v146 = vlaneseq
      %v147 = vshrl.u32 %v146, 7
      %v148 = vadd.s32 %v147, 8
      %v149 = vstv %s98
      %v150 = vadd.s32 %v149, %v147
      %v151 = vadd.s32 %v149, %v148
      %vm152 = vcmp.lt.s32.totalorder %v150, 16
      %vm153 = vcmp.lt.s32.totalorder %v151, 16
      %v154 = vsel %vm152, %v144, 0.0
      %v155 = vsel %vm153, %v145, 0.0
      %v156 = vsel %vm152, %v134, -inf
      %v157 = vsel %vm153, %v135, -inf
      %v158 = vsel %vm152, %v134, inf
      %v159 = vsel %vm153, %v135, inf
      %v160 = vld [vmem:[#allocation8] sm:$0xff]
      %v161 = vadd.f32 %v154, %v155
      %v162 = vadd.f32 %v160, %v161
      %163 = vst [vmem:[#allocation8] sm:$0xff] %v162
      %v164 = vld [vmem:[#allocation9] sm:$0xff]
      %v165 = vmax.f32 %v156, %v157
      %v166 = vmax.f32 %v164, %v165
      %167 = vst [vmem:[#allocation9] sm:$0xff] %v166
      %v168 = vld [vmem:[#allocation11] sm:$0xff]
      %v169 = vmin.f32 %v158, %v159
      %v170 = vmin.f32 %v168, %v169
      %171 = vst [vmem:[#allocation11] sm:$0xff] %v170
    $region37: #{tpu_custom_call.1} parent=1 // pred_fallthru
      _
    // Predicated region
    $region38: #{tpu_custom_call.1} parent=1 // pred_check
      _
    $region39: #{tpu_custom_call.1} parent=1 // pred_check_branch
      %173 = sbr.rel (0) target = $region41
    $region40: #{tpu_custom_call.1} parent=1 // pred_region
      %s175 = ssub.s32 128, 128
      %176 = vsyncadd [#allocation4], %s175
      %s178 = sshll.u32 [#allocation8], 4
      %s179 = int_to_ptr.vmem [resolvable:$true] %s178
      %181 = dma.vmem_to_hbm [thread:$0]  %s179, 128, %s3, [#allocation4]
    $region41: #{tpu_custom_call.1} parent=1 // pred_fallthru
      _
    // Predicated region
    $region42: #{tpu_custom_call.1} parent=1 // pred_check
      _
    $region43: #{tpu_custom_call.1} parent=1 // pred_check_branch
      %183 = sbr.rel (0) target = $region45
    $region44: #{tpu_custom_call.1} parent=1 // pred_region
      %s185 = ssub.s32 128, 128
      %186 = vsyncadd [#allocation10], %s185
      %s188 = sshll.u32 [#allocation9], 4
      %s189 = int_to_ptr.vmem [resolvable:$true] %s188
      %191 = dma.vmem_to_hbm [thread:$0]  %s189, 128, %s4, [#allocation10]
    $region45: #{tpu_custom_call.1} parent=1 // pred_fallthru
      _
    // Predicated region
    $region46: #{tpu_custom_call.1} parent=1 // pred_check
      _
    $region47: #{tpu_custom_call.1} parent=1 // pred_check_branch
      %193 = sbr.rel (0) target = $region49
    $region48: #{tpu_custom_call.1} parent=1 // pred_region
      %s195 = ssub.s32 128, 128
      %196 = vsyncadd [#allocation10], %s195
      %s198 = sshll.u32 [#allocation11], 4
      %s199 = int_to_ptr.vmem [resolvable:$true] %s198
      %201 = dma.vmem_to_hbm [thread:$0]  %s199, 128, %s5, [#allocation10]
    $region49: #{tpu_custom_call.1} parent=1 // pred_fallthru
      _
    // Predicated region
    $region50: #{tpu_custom_call.1} parent=1 // pred_check
      _
    $region51: #{tpu_custom_call.1} parent=1 // pred_check_branch
      %203 = sbr.rel (0) target = $region53
    $region52: #{tpu_custom_call.1} parent=1 // pred_region
      %204 = dma.done [#allocation4], 128
    $region53: #{tpu_custom_call.1} parent=1 // pred_fallthru
      _
    // Predicated region
    $region54: #{tpu_custom_call.1} parent=1 // pred_check
      _
    $region55: #{tpu_custom_call.1} parent=1 // pred_check_branch
      %206 = sbr.rel (0) target = $region57
    $region56: #{tpu_custom_call.1} parent=1 // pred_region
      %207 = dma.done [#allocation10], 128
    $region57: #{tpu_custom_call.1} parent=1 // pred_fallthru
      _
    // Predicated region
    $region58: #{tpu_custom_call.1} parent=1 // pred_check
      _
    $region59: #{tpu_custom_call.1} parent=1 // pred_check_branch
      %209 = sbr.rel (0) target = $region61
    $region60: #{tpu_custom_call.1} parent=1 // pred_region
      %210 = dma.done [#allocation10], 128
    $region61: #{tpu_custom_call.1} parent=1 // pred_fallthru
      _
    %211 = vsyncpa [#allocation3], 1
    %212 = vsyncpa [#allocation6], 1
    %213 = vsyncpa [#allocation4], 1
    %214 = vsyncpa [#allocation10], 1

</llo_original>
